<compile_context>
chip_gen: v7x
topology: tpu7x:2x2x1
jax: 0.10.0
libtpu: 0.0.40
codegen_flags: <defaults>
</compile_context>

<pallas_src>
import numpy as np
import jax
import jax.numpy as jnp
from jax.experimental import pallas as pl
from jax.experimental.pallas import tpu as pltpu


def _count_head_kernel(x_ref, w1_ref, b1_ref, w2_ref, b2_ref, w3_ref, b3_ref, o_ref):
    """One (BN, C, HW) batch tile per grid step: pool -> fc1+ReLU -> fc2+ReLU -> fc3+ReLU."""
    x = x_ref[...]                                           # (BN, C, HW)
    # Global *sum* pool over pixels (lane axis); the 1/HW mean scale is pre-folded
    # into w1 by the wrapper, so h1 = mean_pool(x) @ w1_orig + b1 exactly.
    pooled = jnp.sum(x, axis=-1, dtype=jnp.float32)          # (BN, C)

    h = jnp.dot(pooled, w1_ref[...], preferred_element_type=jnp.float32) + b1_ref[...]
    h = jnp.maximum(h, 0.0)
    # TODO(synk): Dropout(0.3) after each ReLU is identity in eval/inference mode;
    #             training-mode stochastic dropout is not implemented.
    h = jnp.dot(h, w2_ref[...], preferred_element_type=jnp.float32) + b2_ref[...]
    h = jnp.maximum(h, 0.0)
    cnt = jnp.dot(h, w3_ref[...], preferred_element_type=jnp.float32) + b3_ref[...]
    cnt = jnp.maximum(cnt, 0.0)                              # final F.relu
    o_ref[...] = cnt.astype(o_ref.dtype)                     # (BN, 1)


def _round_up(x, m):
    return ((x + m - 1) // m) * m


def _choose_block_n(n):
    # BN=256 fills the v6e/v7x MXU and keeps the double-buffered x tile ~16 MiB;
    # for larger N keep >=2 grid steps so both v7x TensorCores get work.
    if n <= 16:
        return _round_up(max(n, 1), 8)
    return min(256, _round_up(pl.cdiv(n, 2), 8))


def light_global_count_head(x_nchw, params, *, block_n=None):
    """x_nchw: (N, C, H, W) -> (N, 1) predicted counts (matches the PyTorch module)."""
    N, C, H, W = x_nchw.shape
    HW = H * W

    # Free reshape only (no transpose): channels on sublanes, pixels on lanes.
    xf = x_nchw.reshape(N, C, HW)
    if xf.dtype not in (jnp.float32, jnp.bfloat16):
        xf = xf.astype(jnp.float32)

    w1, b1 = params["w1"], params["b1"]          # (C, mid), (mid,)
    w2, b2 = params["w2"], params["b2"]          # (mid, 64), (64,)
    w3, b3 = params["w3"], params["b3"]          # (64, 1),  (1,)
    mid = w1.shape[1]

    # Fold the 1/HW mean scale into w1 (weights are loaded once; bias unscaled).
    w1s = (w1 * (1.0 / float(HW))).astype(jnp.float32)

    BN = _choose_block_n(N) if block_n is None else block_n
    Np = _round_up(N, BN)
    if Np != N:
        xf = jnp.pad(xf, ((0, Np - N), (0, 0), (0, 0)))

    out = pl.pallas_call(
        _count_head_kernel,
        out_shape=jax.ShapeDtypeStruct((Np, 1), jnp.float32),
        grid=(Np // BN,),
        in_specs=[
            pl.BlockSpec((BN, C, HW), lambda n: (n, 0, 0)),   # streaming x tile
            pl.BlockSpec((C, mid), lambda n: (0, 0)),         # fc1 weight (pre-scaled)
            pl.BlockSpec((1, mid), lambda n: (0, 0)),
            pl.BlockSpec((mid, 64), lambda n: (0, 0)),
            pl.BlockSpec((1, 64), lambda n: (0, 0)),
            pl.BlockSpec((64, 1), lambda n: (0, 0)),
            pl.BlockSpec((1, 1), lambda n: (0, 0)),
        ],
        out_specs=pl.BlockSpec((BN, 1), lambda n: (n, 0)),
        compiler_params=pltpu.CompilerParams(dimension_semantics=("parallel",)),
    )(
        xf,
        w1s,
        b1.reshape(1, mid).astype(jnp.float32),
        w2.astype(jnp.float32),
        b2.reshape(1, 64).astype(jnp.float32),
        w3.astype(jnp.float32),
        b3.reshape(1, 1).astype(jnp.float32),
    )
    return out[:N]


def init_params(key, in_channels, mid_channels):
    """Deterministic Linear params (stored as (in, out), i.e. transposed vs PyTorch)."""
    def linear(k, fan_in, fan_out):
        bound = 1.0 / np.sqrt(fan_in)
        kw, kb = jax.random.split(k)
        w = jax.random.uniform(kw, (fan_in, fan_out), jnp.float32, -bound, bound)
        b = jax.random.uniform(kb, (fan_out,), jnp.float32, -bound, bound)
        return w, b

    k1, k2, k3 = jax.random.split(key, 3)
    w1, b1 = linear(k1, in_channels, mid_channels)
    w2, b2 = linear(k2, mid_channels, 64)
    w3, b3 = linear(k3, 64, 1)
    return dict(w1=w1, b1=b1, w2=w2, b2=b2, w3=w3, b3=b3)


def _reference(x_nchw, params):
    pooled = jnp.mean(x_nchw.astype(jnp.float32), axis=(2, 3))   # (N, C)
    h = jnp.maximum(pooled @ params["w1"] + params["b1"], 0.0)
    h = jnp.maximum(h @ params["w2"] + params["b2"], 0.0)
    return jnp.maximum(h @ params["w3"] + params["b3"], 0.0)     # (N, 1)


if __name__ == "__main__":
    N, C, H, W = 2, 32, 16, 16
    MID = 64
    key = jax.random.PRNGKey(0)
    kx, kp = jax.random.split(key)
    x = jax.random.normal(kx, (N, C, H, W), dtype=jnp.float32)
    params = init_params(kp, in_channels=C, mid_channels=MID)

    out = light_global_count_head(x, params)
    out = jax.block_until_ready(out)

    assert out.shape == (N, 1), out.shape
    assert bool(jnp.all(jnp.isfinite(out)))
    ref = _reference(x, params)
    assert bool(jnp.allclose(out, ref, atol=1e-2, rtol=1e-2)), (out, ref)
    print("KERNEL_OK")
</pallas_src>

<mosaic_0001>
module attributes {stable_mosaic.version = 11 : i64} {
  func.func @_count_head_kernel(%arg0: i32, %arg1: memref<8x32x256xf32, #tpu.memory_space<vmem>>, %arg2: memref<32x64xf32, #tpu.memory_space<vmem>>, %arg3: memref<1x64xf32, #tpu.memory_space<vmem>>, %arg4: memref<64x64xf32, #tpu.memory_space<vmem>>, %arg5: memref<1x64xf32, #tpu.memory_space<vmem>>, %arg6: memref<64x1xf32, #tpu.memory_space<vmem>>, %arg7: memref<1x1xf32, #tpu.memory_space<vmem>>, %arg8: memref<8x1xf32, #tpu.memory_space<vmem>>) attributes {dimension_semantics = [#tpu.dimension_semantics<parallel>], iteration_bounds = array<i64: 1>, scalar_prefetch = 0 : i64, scratch_operands = 0 : i64, tpu.core_type = #tpu.core_type<tc>, window_params = [{transform_indices = @transform_0, window_bounds = array<i64: 8, 32, 256>}, {pipeline_mode = #tpu.pipeline_mode<synchronous>, transform_indices = @transform_1, window_bounds = array<i64: 32, 64>}, {pipeline_mode = #tpu.pipeline_mode<synchronous>, transform_indices = @transform_2, window_bounds = array<i64: 1, 64>}, {pipeline_mode = #tpu.pipeline_mode<synchronous>, transform_indices = @transform_3, window_bounds = array<i64: 64, 64>}, {pipeline_mode = #tpu.pipeline_mode<synchronous>, transform_indices = @transform_4, window_bounds = array<i64: 1, 64>}, {pipeline_mode = #tpu.pipeline_mode<synchronous>, transform_indices = @transform_5, window_bounds = array<i64: 64, 1>}, {pipeline_mode = #tpu.pipeline_mode<synchronous>, transform_indices = @transform_6, window_bounds = array<i64: 1, 1>}, {transform_indices = @transform_7, window_bounds = array<i64: 8, 1>}]} {
    %c0 = arith.constant 0 : index
    %c0_0 = arith.constant 0 : index
    %c0_1 = arith.constant 0 : index
    %0 = vector.load %arg1[%c0, %c0_0, %c0_1] : memref<8x32x256xf32, #tpu.memory_space<vmem>>, vector<8x32x256xf32>
    %cst = arith.constant dense<0.000000e+00> : vector<8x32xf32>
    %1 = vector.multi_reduction <add>, %0, %cst [2] : vector<8x32x256xf32> to vector<8x32xf32>
    %c0_2 = arith.constant 0 : index
    %c0_3 = arith.constant 0 : index
    %2 = vector.load %arg2[%c0_2, %c0_3] : memref<32x64xf32, #tpu.memory_space<vmem>>, vector<32x64xf32>
    %cst_4 = arith.constant dense<0.000000e+00> : vector<8x64xf32>
    %3 = tpu.matmul %1, %2, %cst_4 {dimension_numbers = #tpu.dot_dimension_numbers<[1], [0], [0], [1], [0, 0, 1, 1], [], []>} : vector<8x32xf32>, vector<32x64xf32>, vector<8x64xf32> -> vector<8x64xf32>
    %c0_5 = arith.constant 0 : index
    %c0_6 = arith.constant 0 : index
    %4 = vector.load %arg3[%c0_5, %c0_6] : memref<1x64xf32, #tpu.memory_space<vmem>>, vector<1x64xf32>
    %5 = vector.broadcast %4 : vector<1x64xf32> to vector<8x64xf32>
    %6 = arith.addf %3, %5 : vector<8x64xf32>
    %cst_7 = arith.constant 0.000000e+00 : f32
    %7 = vector.broadcast %cst_7 : f32 to vector<8x64xf32>
    %8 = arith.maximumf %6, %7 : vector<8x64xf32>
    %c0_8 = arith.constant 0 : index
    %c0_9 = arith.constant 0 : index
    %9 = vector.load %arg4[%c0_8, %c0_9] : memref<64x64xf32, #tpu.memory_space<vmem>>, vector<64x64xf32>
    %cst_10 = arith.constant dense<0.000000e+00> : vector<8x64xf32>
    %10 = tpu.matmul %8, %9, %cst_10 {dimension_numbers = #tpu.dot_dimension_numbers<[1], [0], [0], [1], [0, 0, 1, 1], [], []>} : vector<8x64xf32>, vector<64x64xf32>, vector<8x64xf32> -> vector<8x64xf32>
    %c0_11 = arith.constant 0 : index
    %c0_12 = arith.constant 0 : index
    %11 = vector.load %arg5[%c0_11, %c0_12] : memref<1x64xf32, #tpu.memory_space<vmem>>, vector<1x64xf32>
    %12 = vector.broadcast %11 : vector<1x64xf32> to vector<8x64xf32>
    %13 = arith.addf %10, %12 : vector<8x64xf32>
    %cst_13 = arith.constant 0.000000e+00 : f32
    %14 = vector.broadcast %cst_13 : f32 to vector<8x64xf32>
    %15 = arith.maximumf %13, %14 : vector<8x64xf32>
    %c0_14 = arith.constant 0 : index
    %c0_15 = arith.constant 0 : index
    %16 = vector.load %arg6[%c0_14, %c0_15] : memref<64x1xf32, #tpu.memory_space<vmem>>, vector<64x1xf32>
    %cst_16 = arith.constant dense<0.000000e+00> : vector<8x1xf32>
    %17 = tpu.matmul %15, %16, %cst_16 {dimension_numbers = #tpu.dot_dimension_numbers<[1], [0], [0], [1], [0, 0, 1, 1], [], []>} : vector<8x64xf32>, vector<64x1xf32>, vector<8x1xf32> -> vector<8x1xf32>
    %c0_17 = arith.constant 0 : index
    %c0_18 = arith.constant 0 : index
    %18 = vector.load %arg7[%c0_17, %c0_18] : memref<1x1xf32, #tpu.memory_space<vmem>>, vector<1x1xf32>
    %19 = vector.broadcast %18 : vector<1x1xf32> to vector<8x1xf32>
    %20 = arith.addf %17, %19 : vector<8x1xf32>
    %cst_19 = arith.constant 0.000000e+00 : f32
    %21 = vector.broadcast %cst_19 : f32 to vector<8x1xf32>
    %22 = arith.maximumf %20, %21 : vector<8x1xf32>
    %c0_20 = arith.constant 0 : index
    %c0_21 = arith.constant 0 : index
    %23 = vector.load %arg8[%c0_20, %c0_21] : memref<8x1xf32, #tpu.memory_space<vmem>>, vector<8x1xf32>
    tpu.vector_store %arg8[%c0_20, %c0_21], %22 {strides = array<i32>} : memref<8x1xf32, #tpu.memory_space<vmem>>, vector<8x1xf32>,
    return
  }
  func.func @transform_0(%arg0: i32) -> (i32, i32, i32) {
    %c0_i32 = arith.constant 0 : i32
    %c0_i32_0 = arith.constant 0 : i32
    %c0_i32_1 = arith.constant 0 : i32
    return %arg0, %c0_i32, %c0_i32_0 : i32, i32, i32
  }
  func.func @transform_1(%arg0: i32) -> (i32, i32) {
    %c0_i32 = arith.constant 0 : i32
    %c0_i32_0 = arith.constant 0 : i32
    %c0_i32_1 = arith.constant 0 : i32
    return %c0_i32, %c0_i32_0 : i32, i32
  }
  func.func @transform_2(%arg0: i32) -> (i32, i32) {
    %c0_i32 = arith.constant 0 : i32
    %c0_i32_0 = arith.constant 0 : i32
    %c0_i32_1 = arith.constant 0 : i32
    return %c0_i32, %c0_i32_0 : i32, i32
  }
  func.func @transform_3(%arg0: i32) -> (i32, i32) {
    %c0_i32 = arith.constant 0 : i32
    %c0_i32_0 = arith.constant 0 : i32
    %c0_i32_1 = arith.constant 0 : i32
    return %c0_i32, %c0_i32_0 : i32, i32
  }
  func.func @transform_4(%arg0: i32) -> (i32, i32) {
    %c0_i32 = arith.constant 0 : i32
    %c0_i32_0 = arith.constant 0 : i32
    %c0_i32_1 = arith.constant 0 : i32
    return %c0_i32, %c0_i32_0 : i32, i32
  }
  func.func @transform_5(%arg0: i32) -> (i32, i32) {
    %c0_i32 = arith.constant 0 : i32
    %c0_i32_0 = arith.constant 0 : i32
    %c0_i32_1 = arith.constant 0 : i32
    return %c0_i32, %c0_i32_0 : i32, i32
  }
  func.func @transform_6(%arg0: i32) -> (i32, i32) {
    %c0_i32 = arith.constant 0 : i32
    %c0_i32_0 = arith.constant 0 : i32
    %c0_i32_1 = arith.constant 0 : i32
    return %c0_i32, %c0_i32_0 : i32, i32
  }
  func.func @transform_7(%arg0: i32) -> (i32, i32) {
    %c0_i32 = arith.constant 0 : i32
    %c0_i32_0 = arith.constant 0 : i32
    return %arg0, %c0_i32 : i32, i32
  }
}

</mosaic_0001>

<llo_original>
// kernel: tpu_custom_call.1
$region0: #{tpu_custom_call.1}
  #allocation0 [shape = 'u32[]', space=smem, size = 0x4, offset = 0x4, fixed_abs, tag = 'smem constant byte address 0x4 - core index']
  #allocation1 [shape = 'u32[144,128]{1,0:T(1,128)}', space=vmem, size = 0x12000, scoped, tag = 'internal scratch']
  #allocation2 [shape = 'f32[1,1]{1,0:T(1,128)S(1)}', space=vmem, size = 0x200, scoped, tag = 'scoped memory for tpu_custom_call.1']
  %s0 = inlined_call_operand.hbm [shape: f32[8,32,256], index: 0, kind: input, shape index: {}]
  %s1 = inlined_call_operand.hbm [shape: f32[32,64], index: 1, kind: input, shape index: {}]
  %s2 = inlined_call_operand.vmem [shape: f32[1,64], index: 2, kind: input, shape index: {}]
  %s3 = inlined_call_operand.vmem [shape: f32[64,64], index: 3, kind: input, shape index: {}]
  %s4 = inlined_call_operand.vmem [shape: f32[1,64], index: 4, kind: input, shape index: {}]
  %s5 = inlined_call_operand.vmem [shape: f32[64,1], index: 5, kind: input, shape index: {}]
  %s6 = inlined_call_operand.<no memory space> [shape: f32[1,1], index: 6, kind: input, shape index: {}]
  %s7 = inlined_call_operand.vmem [shape: f32[8,1], index: 7, kind: output, shape index: {}]
  %s8 = sld [smem:[#allocation0]]
  $region46: #{tpu_custom_call.1} parent=0
    _
  %s10 = ssub.s32 1, %s8
  %s11 = scalar_select 0, %s10, %s8
  %v12 = vstv %s6
  %13 = vst [vmem:[#allocation2] sm:$0x1] %v12
  $region1: #{tpu_custom_call.1} parent=0
    #allocation3 [shape = 'u8[262144]{0}', space=vmem, size = 0x40000, scoped, tag = 'input window, operand 0, single buffered']
    #allocation4 [shape = 's32[1]{0}', space=sflag, size = 0x4, scoped, tag = 'scoped memory for tpu_custom_call.1']
    #allocation5 [shape = 'u8[16384]{0}', space=vmem, size = 0x4000, scoped, tag = 'input window, operand 1, single buffered']
    #allocation6 [shape = 's32[1]{0}', space=sflag, size = 0x4, scoped, tag = 'scoped memory for tpu_custom_call.1']
    %14 = vsyncpa [#allocation4], 0
    %15 = vsyncpa [#allocation6], 0
    // Predicated region
    $region2: #{tpu_custom_call.1} parent=1 // pred_check
      _
    $region3: #{tpu_custom_call.1} parent=1 // pred_check_branch
      %17 = sbr.rel (0) target = $region5
    $region4: #{tpu_custom_call.1} parent=1 // pred_region
      %s19 = ssub.s32 8192, 8192
      %20 = vsyncadd [#allocation4], %s19
      %s21 = sshll.u32 [#allocation3], 4
      %s22 = int_to_ptr.vmem [resolvable:$true] %s21
      %27 = dma.hbm_to_vmem [thread:$0]  %s0, 8192, %s22, [#allocation4], 256, 256, 16
    $region5: #{tpu_custom_call.1} parent=1 // pred_fallthru
      _
    // Predicated region
    $region6: #{tpu_custom_call.1} parent=1 // pred_check
      _
    $region7: #{tpu_custom_call.1} parent=1 // pred_check_branch
      %29 = sbr.rel (0) target = $region9
    $region8: #{tpu_custom_call.1} parent=1 // pred_region
      %s31 = ssub.s32 512, 512
      %32 = vsyncadd [#allocation6], %s31
      %s33 = sshll.u32 [#allocation5], 4
      %s34 = int_to_ptr.vmem [resolvable:$true] %s33
      %39 = dma.hbm_to_vmem [thread:$0]  %s1, 512, %s34, [#allocation6], 128, 128, 8
    $region9: #{tpu_custom_call.1} parent=1 // pred_fallthru
      _
    // Predicated region
    $region10: #{tpu_custom_call.1} parent=1 // pred_check
      _
    $region11: #{tpu_custom_call.1} parent=1 // pred_check_branch
      %41 = sbr.rel (0) target = $region13
    $region12: #{tpu_custom_call.1} parent=1 // pred_region
      _
    $region13: #{tpu_custom_call.1} parent=1 // pred_fallthru
      _
    // Predicated region
    $region14: #{tpu_custom_call.1} parent=1 // pred_check
      _
    $region15: #{tpu_custom_call.1} parent=1 // pred_check_branch
      %43 = sbr.rel (0) target = $region17
    $region16: #{tpu_custom_call.1} parent=1 // pred_region
      _
    $region17: #{tpu_custom_call.1} parent=1 // pred_fallthru
      _
    // Predicated region
    $region18: #{tpu_custom_call.1} parent=1 // pred_check
      _
    $region19: #{tpu_custom_call.1} parent=1 // pred_check_branch
      %45 = sbr.rel (0) target = $region21
    $region20: #{tpu_custom_call.1} parent=1 // pred_region
      _
    $region21: #{tpu_custom_call.1} parent=1 // pred_fallthru
      _
    // Predicated region
    $region22: #{tpu_custom_call.1} parent=1 // pred_check
      _
    $region23: #{tpu_custom_call.1} parent=1 // pred_check_branch
      %47 = sbr.rel (0) target = $region25
    $region24: #{tpu_custom_call.1} parent=1 // pred_region
      _
    $region25: #{tpu_custom_call.1} parent=1 // pred_fallthru
      _
    // Predicated region
    $region26: #{tpu_custom_call.1} parent=1 // pred_check
      _
    $region27: #{tpu_custom_call.1} parent=1 // pred_check_branch
      %49 = sbr.rel (0) target = $region29
    $region28: #{tpu_custom_call.1} parent=1 // pred_region
      _
    $region29: #{tpu_custom_call.1} parent=1 // pred_fallthru
      _
    // Predicated region
    $region30: #{tpu_custom_call.1} parent=1 // pred_check
      _
    $region31: #{tpu_custom_call.1} parent=1 // pred_check_branch
      %51 = sbr.rel (0) target = $region33
    $region32: #{tpu_custom_call.1} parent=1 // pred_region
      %52 = dma.done [#allocation4], 8192
    $region33: #{tpu_custom_call.1} parent=1 // pred_fallthru
      _
    // Predicated region
    $region34: #{tpu_custom_call.1} parent=1 // pred_check
      _
    $region35: #{tpu_custom_call.1} parent=1 // pred_check_branch
      %54 = sbr.rel (0) target = $region37
    $region36: #{tpu_custom_call.1} parent=1 // pred_region
      %55 = dma.done [#allocation6], 512
    $region37: #{tpu_custom_call.1} parent=1 // pred_fallthru
      _
    %v56 = vld [vmem:[#allocation3] sm:$0xff]
    %v57 = vld [vmem:[#allocation3 + $0x8] sm:$0xff]
    %v58 = vld [vmem:[#allocation3 + $0x10] sm:$0xff]
    %v59 = vld [vmem:[#allocation3 + $0x18] sm:$0xff]
    %v60 = vld [vmem:[#allocation3 + $0x20] sm:$0xff]
    %v61 = vld [vmem:[#allocation3 + $0x28] sm:$0xff]
    %v62 = vld [vmem:[#allocation3 + $0x30] sm:$0xff]
    %v63 = vld [vmem:[#allocation3 + $0x38] sm:$0xff]
    %v64 = vld [vmem:[#allocation3 + $0x40] sm:$0xff]
    %v65 = vld [vmem:[#allocation3 + $0x48] sm:$0xff]
    %v66 = vld [vmem:[#allocation3 + $0x50] sm:$0xff]
    %v67 = vld [vmem:[#allocation3 + $0x58] sm:$0xff]
    %v68 = vld [vmem:[#allocation3 + $0x60] sm:$0xff]
    %v69 = vld [vmem:[#allocation3 + $0x68] sm:$0xff]
    %v70 = vld [vmem:[#allocation3 + $0x70] sm:$0xff]
    %v71 = vld [vmem:[#allocation3 + $0x78] sm:$0xff]
    %v72 = vld [vmem:[#allocation3 + $0x80] sm:$0xff]
    %v73 = vld [vmem:[#allocation3 + $0x88] sm:$0xff]
    %v74 = vld [vmem:[#allocation3 + $0x90] sm:$0xff]
    %v75 = vld [vmem:[#allocation3 + $0x98] sm:$0xff]
    %v76 = vld [vmem:[#allocation3 + $0xa0] sm:$0xff]
    %v77 = vld [vmem:[#allocation3 + $0xa8] sm:$0xff]
    %v78 = vld [vmem:[#allocation3 + $0xb0] sm:$0xff]
    %v79 = vld [vmem:[#allocation3 + $0xb8] sm:$0xff]
    %v80 = vld [vmem:[#allocation3 + $0xc0] sm:$0xff]
    %v81 = vld [vmem:[#allocation3 + $0xc8] sm:$0xff]
    %v82 = vld [vmem:[#allocation3 + $0xd0] sm:$0xff]
    %v83 = vld [vmem:[#allocation3 + $0xd8] sm:$0xff]
    %v84 = vld [vmem:[#allocation3 + $0xe0] sm:$0xff]
    %v85 = vld [vmem:[#allocation3 + $0xe8] sm:$0xff]
    %v86 = vld [vmem:[#allocation3 + $0xf0] sm:$0xff]
    %v87 = vld [vmem:[#allocation3 + $0xf8] sm:$0xff]
    %v88 = vld [vmem:[#allocation3 + $0x100] sm:$0xff]
    %v89 = vld [vmem:[#allocation3 + $0x108] sm:$0xff]
    %v90 = vld [vmem:[#allocation3 + $0x110] sm:$0xff]
    %v91 = vld [vmem:[#allocation3 + $0x118] sm:$0xff]
    %v92 = vld [vmem:[#allocation3 + $0x120] sm:$0xff]
    %v93 = vld [vmem:[#allocation3 + $0x128] sm:$0xff]
    %v94 = vld [vmem:[#allocation3 + $0x130] sm:$0xff]
    %v95 = vld [vmem:[#allocation3 + $0x138] sm:$0xff]
    %v96 = vld [vmem:[#allocation3 + $0x140] sm:$0xff]
    %v97 = vld [vmem:[#allocation3 + $0x148] sm:$0xff]
    %v98 = vld [vmem:[#allocation3 + $0x150] sm:$0xff]
    %v99 = vld [vmem:[#allocation3 + $0x158] sm:$0xff]
    %v100 = vld [vmem:[#allocation3 + $0x160] sm:$0xff]
    %v101 = vld [vmem:[#allocation3 + $0x168] sm:$0xff]
    %v102 = vld [vmem:[#allocation3 + $0x170] sm:$0xff]
    %v103 = vld [vmem:[#allocation3 + $0x178] sm:$0xff]
    %v104 = vld [vmem:[#allocation3 + $0x180] sm:$0xff]
    %v105 = vld [vmem:[#allocation3 + $0x188] sm:$0xff]
    %v106 = vld [vmem:[#allocation3 + $0x190] sm:$0xff]
    %v107 = vld [vmem:[#allocation3 + $0x198] sm:$0xff]
    %v108 = vld [vmem:[#allocation3 + $0x1a0] sm:$0xff]
    %v109 = vld [vmem:[#allocation3 + $0x1a8] sm:$0xff]
    %v110 = vld [vmem:[#allocation3 + $0x1b0] sm:$0xff]
    %v111 = vld [vmem:[#allocation3 + $0x1b8] sm:$0xff]
    %v112 = vld [vmem:[#allocation3 + $0x1c0] sm:$0xff]
    %v113 = vld [vmem:[#allocation3 + $0x1c8] sm:$0xff]
    %v114 = vld [vmem:[#allocation3 + $0x1d0] sm:$0xff]
    %v115 = vld [vmem:[#allocation3 + $0x1d8] sm:$0xff]
    %v116 = vld [vmem:[#allocation3 + $0x1e0] sm:$0xff]
    %v117 = vld [vmem:[#allocation3 + $0x1e8] sm:$0xff]
    %v118 = vld [vmem:[#allocation3 + $0x1f0] sm:$0xff]
    %v119 = vld [vmem:[#allocation3 + $0x1f8] sm:$0xff]
    %v120 = vadd.f32 %v56, %v57
    %121 = vadd.xlane.f32.xlu0 %v120
    %v122 = vpop.xlane.xlu0 %121
    %v123 = vadd.f32 %v58, %v59
    %124 = vadd.xlane.f32.xlu0 %v123
    %v125 = vpop.xlane.xlu0 %124
    %v126 = vadd.f32 %v60, %v61
    %127 = vadd.xlane.f32.xlu0 %v126
    %v128 = vpop.xlane.xlu0 %127
    %v129 = vadd.f32 %v62, %v63
    %130 = vadd.xlane.f32.xlu0 %v129
    %v131 = vpop.xlane.xlu0 %130
    %v132 = vadd.f32 %v64, %v65
    %133 = vadd.xlane.f32.xlu0 %v132
    %v134 = vpop.xlane.xlu0 %133
    %v135 = vadd.f32 %v66, %v67
    %136 = vadd.xlane.f32.xlu0 %v135
    %v137 = vpop.xlane.xlu0 %136
    %v138 = vadd.f32 %v68, %v69
    %139 = vadd.xlane.f32.xlu0 %v138
    %v140 = vpop.xlane.xlu0 %139
    %v141 = vadd.f32 %v70, %v71
    %142 = vadd.xlane.f32.xlu0 %v141
    %v143 = vpop.xlane.xlu0 %142
    %v144 = vadd.f32 %v72, %v73
    %145 = vadd.xlane.f32.xlu0 %v144
    %v146 = vpop.xlane.xlu0 %145
    %v147 = vadd.f32 %v74, %v75
    %148 = vadd.xlane.f32.xlu0 %v147
    %v149 = vpop.xlane.xlu0 %148
    %v150 = vadd.f32 %v76, %v77
    %151 = vadd.xlane.f32.xlu0 %v150
    %v152 = vpop.xlane.xlu0 %151
    %v153 = vadd.f32 %v78, %v79
    %154 = vadd.xlane.f32.xlu0 %v153
    %v155 = vpop.xlane.xlu0 %154
    %v156 = vadd.f32 %v80, %v81
    %157 = vadd.xlane.f32.xlu0 %v156
    %v158 = vpop.xlane.xlu0 %157
    %v159 = vadd.f32 %v82, %v83
    %160 = vadd.xlane.f32.xlu0 %v159
    %v161 = vpop.xlane.xlu0 %160
    %v162 = vadd.f32 %v84, %v85
    %163 = vadd.xlane.f32.xlu0 %v162
    %v164 = vpop.xlane.xlu0 %163
    %v165 = vadd.f32 %v86, %v87
    %166 = vadd.xlane.f32.xlu0 %v165
    %v167 = vpop.xlane.xlu0 %166
    %v168 = vadd.f32 %v88, %v89
    %169 = vadd.xlane.f32.xlu0 %v168
    %v170 = vpop.xlane.xlu0 %169
    %v171 = vadd.f32 %v90, %v91
    %172 = vadd.xlane.f32.xlu0 %v171
    %v173 = vpop.xlane.xlu0 %172
    %v174 = vadd.f32 %v92, %v93
    %175 = vadd.xlane.f32.xlu0 %v174
    %v176 = vpop.xlane.xlu0 %175
    %v177 = vadd.f32 %v94, %v95
    %178 = vadd.xlane.f32.xlu0 %v177
    %v179 = vpop.xlane.xlu0 %178
    %v180 = vadd.f32 %v96, %v97
    %181 = vadd.xlane.f32.xlu0 %v180
    %v182 = vpop.xlane.xlu0 %181
    %v183 = vadd.f32 %v98, %v99
    %184 = vadd.xlane.f32.xlu0 %v183
    %v185 = vpop.xlane.xlu0 %184
    %v186 = vadd.f32 %v100, %v101
    %187 = vadd.xlane.f32.xlu0 %v186
    %v188 = vpop.xlane.xlu0 %187
    %v189 = vadd.f32 %v102, %v103
    %190 = vadd.xlane.f32.xlu0 %v189
    %v191 = vpop.xlane.xlu0 %190
    %v192 = vadd.f32 %v104, %v105
    %193 = vadd.xlane.f32.xlu0 %v192
    %v194 = vpop.xlane.xlu0 %193
    %v195 = vadd.f32 %v106, %v107
    %196 = vadd.xlane.f32.xlu0 %v195
    %v197 = vpop.xlane.xlu0 %196
    %v198 = vadd.f32 %v108, %v109
    %199 = vadd.xlane.f32.xlu0 %v198
    %v200 = vpop.xlane.xlu0 %199
    %v201 = vadd.f32 %v110, %v111
    %202 = vadd.xlane.f32.xlu0 %v201
    %v203 = vpop.xlane.xlu0 %202
    %v204 = vadd.f32 %v112, %v113
    %205 = vadd.xlane.f32.xlu0 %v204
    %v206 = vpop.xlane.xlu0 %205
    %v207 = vadd.f32 %v114, %v115
    %208 = vadd.xlane.f32.xlu0 %v207
    %v209 = vpop.xlane.xlu0 %208
    %v210 = vadd.f32 %v116, %v117
    %211 = vadd.xlane.f32.xlu0 %v210
    %v212 = vpop.xlane.xlu0 %211
    %v213 = vadd.f32 %v118, %v119
    %214 = vadd.xlane.f32.xlu0 %v213
    %v215 = vpop.xlane.xlu0 %214
    %v216 = vld [vmem:[#allocation5] sm:$0xff]
    %v217 = vld [vmem:[#allocation5 + $0x8] sm:$0xff]
    %v218 = vld [vmem:[#allocation5 + $0x10] sm:$0xff]
    %v219 = vld [vmem:[#allocation5 + $0x18] sm:$0xff]
    %v220 = vld [vmem:[%s2] sm:$0x1]
    %v222 = vlaneseq
    %v223 = vshrl.u32 %v222, 7
    %v224 = vsub.s32 0, %v223
    %v225 = vrot.slane %v220, %v224
    %v259 = vlaneseq
    %v260 = vand.u32 %v259, 127
    %v261 = vlaneseq
    %v262 = vshrl.u32 %v261, 7
    %v263 = vsub.s32 %v260, %v262
    %v264 = vrot.slane %v122, %v263
    %v265 = vadd.s32 %v260, 4294967288
    %v266 = vlaneseq
    %v267 = vshrl.u32 %v266, 7
    %v268 = vsub.s32 %v265, %v267
    %v269 = vrot.slane %v125, %v268
    %vm270 = vcmask 130112
    %v271 = vsel %vm270, %v269, %v264
    %v272 = vadd.s32 %v260, 4294967280
    %v273 = vlaneseq
    %v274 = vshrl.u32 %v273, 7
    %v275 = vsub.s32 %v272, %v274
    %v276 = vrot.slane %v128, %v275
    %vm277 = vcmask 195712
    %v278 = vsel %vm277, %v276, %v271
    %v279 = vadd.s32 %v260, 4294967272
    %v280 = vlaneseq
    %v281 = vshrl.u32 %v280, 7
    %v282 = vsub.s32 %v279, %v281
    %v283 = vrot.slane %v131, %v282
    %vm284 = vcmask 261312
    %v285 = vsel %vm284, %v283, %v278
    %v286 = vlaneseq
    %v287 = vshrl.u32 %v286, 7
    %v288 = vsub.s32 %v260, %v287
    %v289 = vrot.slane %v134, %v288
    %v290 = vlaneseq
    %v291 = vshrl.u32 %v290, 7
    %v292 = vsub.s32 %v265, %v291
    %v293 = vrot.slane %v137, %v292
    %v294 = vsel %vm270, %v293, %v289
    %v295 = vlaneseq
    %v296 = vshrl.u32 %v295, 7
    %v297 = vsub.s32 %v272, %v296
    %v298 = vrot.slane %v140, %v297
    %v299 = vsel %vm277, %v298, %v294
    %v300 = vlaneseq
    %v301 = vshrl.u32 %v300, 7
    %v302 = vsub.s32 %v279, %v301
    %v303 = vrot.slane %v143, %v302
    %v304 = vsel %vm284, %v303, %v299
    %v305 = vlaneseq
    %v306 = vshrl.u32 %v305, 7
    %v307 = vsub.s32 %v260, %v306
    %v308 = vrot.slane %v146, %v307
    %v309 = vlaneseq
    %v310 = vshrl.u32 %v309, 7
    %v311 = vsub.s32 %v265, %v310
    %v312 = vrot.slane %v149, %v311
    %v313 = vsel %vm270, %v312, %v308
    %v314 = vlaneseq
    %v315 = vshrl.u32 %v314, 7
    %v316 = vsub.s32 %v272, %v315
    %v317 = vrot.slane %v152, %v316
    %v318 = vsel %vm277, %v317, %v313
    %v319 = vlaneseq
    %v320 = vshrl.u32 %v319, 7
    %v321 = vsub.s32 %v279, %v320
    %v322 = vrot.slane %v155, %v321
    %v323 = vsel %vm284, %v322, %v318
    %v324 = vlaneseq
    %v325 = vshrl.u32 %v324, 7
    %v326 = vsub.s32 %v260, %v325
    %v327 = vrot.slane %v158, %v326
    %v328 = vlaneseq
    %v329 = vshrl.u32 %v328, 7
    %v330 = vsub.s32 %v265, %v329
    %v331 = vrot.slane %v161, %v330
    %v332 = vsel %vm270, %v331, %v327
    %v333 = vlaneseq
    %v334 = vshrl.u32 %v333, 7
    %v335 = vsub.s32 %v272, %v334
    %v336 = vrot.slane %v164, %v335
    %v337 = vsel %vm277, %v336, %v332
    %v338 = vlaneseq
    %v339 = vshrl.u32 %v338, 7
    %v340 = vsub.s32 %v279, %v339
    %v341 = vrot.slane %v167, %v340
    %v342 = vsel %vm284, %v341, %v337
    %v343 = vlaneseq
    %v344 = vshrl.u32 %v343, 7
    %v345 = vsub.s32 %v260, %v344
    %v346 = vrot.slane %v170, %v345
    %v347 = vlaneseq
    %v348 = vshrl.u32 %v347, 7
    %v349 = vsub.s32 %v265, %v348
    %v350 = vrot.slane %v173, %v349
    %v351 = vsel %vm270, %v350, %v346
    %v352 = vlaneseq
    %v353 = vshrl.u32 %v352, 7
    %v354 = vsub.s32 %v272, %v353
    %v355 = vrot.slane %v176, %v354
    %v356 = vsel %vm277, %v355, %v351
    %v357 = vlaneseq
    %v358 = vshrl.u32 %v357, 7
    %v359 = vsub.s32 %v279, %v358
    %v360 = vrot.slane %v179, %v359
    %v361 = vsel %vm284, %v360, %v356
    %v362 = vlaneseq
    %v363 = vshrl.u32 %v362, 7
    %v364 = vsub.s32 %v260, %v363
    %v365 = vrot.slane %v182, %v364
    %v366 = vlaneseq
    %v367 = vshrl.u32 %v366, 7
    %v368 = vsub.s32 %v265, %v367
    %v369 = vrot.slane %v185, %v368
    %v370 = vsel %vm270, %v369, %v365
    %v371 = vlaneseq
    %v372 = vshrl.u32 %v371, 7
    %v373 = vsub.s32 %v272, %v372
    %v374 = vrot.slane %v188, %v373
    %v375 = vsel %vm277, %v374, %v370
    %v376 = vlaneseq
    %v377 = vshrl.u32 %v376, 7
    %v378 = vsub.s32 %v279, %v377
    %v379 = vrot.slane %v191, %v378
    %v380 = vsel %vm284, %v379, %v375
    %v381 = vlaneseq
    %v382 = vshrl.u32 %v381, 7
    %v383 = vsub.s32 %v260, %v382
    %v384 = vrot.slane %v194, %v383
    %v385 = vlaneseq
    %v386 = vshrl.u32 %v385, 7
    %v387 = vsub.s32 %v265, %v386
    %v388 = vrot.slane %v197, %v387
    %v389 = vsel %vm270, %v388, %v384
    %v390 = vlaneseq
    %v391 = vshrl.u32 %v390, 7
    %v392 = vsub.s32 %v272, %v391
    %v393 = vrot.slane %v200, %v392
    %v394 = vsel %vm277, %v393, %v389
    %v395 = vlaneseq
    %v396 = vshrl.u32 %v395, 7
    %v397 = vsub.s32 %v279, %v396
    %v398 = vrot.slane %v203, %v397
    %v399 = vsel %vm284, %v398, %v394
    %v400 = vlaneseq
    %v401 = vshrl.u32 %v400, 7
    %v402 = vsub.s32 %v260, %v401
    %v403 = vrot.slane %v206, %v402
    %v404 = vlaneseq
    %v405 = vshrl.u32 %v404, 7
    %v406 = vsub.s32 %v265, %v405
    %v407 = vrot.slane %v209, %v406
    %v408 = vsel %vm270, %v407, %v403
    %v409 = vlaneseq
    %v410 = vshrl.u32 %v409, 7
    %v411 = vsub.s32 %v272, %v410
    %v412 = vrot.slane %v212, %v411
    %v413 = vsel %vm277, %v412, %v408
    %v414 = vlaneseq
    %v415 = vshrl.u32 %v414, 7
    %v416 = vsub.s32 %v279, %v415
    %v417 = vrot.slane %v215, %v416
    %v418 = vsel %vm284, %v417, %v413
    %vm419 = vcmask 1041409
    %v420 = vsel %vm419, %v304, %v285
    %vm421 = vcmask 1042434
    %v422 = vsel %vm421, %v323, %v420
    %vm423 = vcmask 1043459
    %v424 = vsel %vm423, %v342, %v422
    %vm425 = vcmask 1044484
    %v426 = vsel %vm425, %v361, %v424
    %vm427 = vcmask 1045509
    %v428 = vsel %vm427, %v380, %v426
    %vm429 = vcmask 1046534
    %v430 = vsel %vm429, %v399, %v428
    %vm431 = vcmask 1047559
    %v432 = vsel %vm431, %v418, %v430
    %vm433 = vcmask 261120
    %v434 = vsel %vm433, %v432, 0
    %436 = vmatprep.subr.mxu0 0.0
    %437 = vmatpush1.msra.mxu0 %v216
    %438 = vmatprep.subr.mxu0 0.0
    %439 = vmatpush1.msra.mxu0 %v217
    %440 = vmatprep.subr.mxu0 0.0
    %441 = vmatpush1.msra.mxu0 %v218
    %442 = vmatprep.subr.mxu0 0.0
    %443 = vmatpush1.msra.mxu0 %v219
    %444 = vmatprep.subr.mxu0 0.0
    %445 = vmatpush1.msra.mxu0 0.0
    %446 = vmatprep.subr.mxu0 0.0
    %447 = vmatpush1.msra.mxu0 0.0
    %448 = vmatprep.subr.mxu0 0.0
    %449 = vmatpush1.msra.mxu0 0.0
    %450 = vmatprep.subr.mxu0 0.0
    %451 = vmatpush1.msra.mxu0 0.0
    %452 = vmatprep.subr.mxu0 0.0
    %453 = vmatpush1.msra.mxu0 0.0
    %454 = vmatprep.subr.mxu0 0.0
    %455 = vmatpush1.msra.mxu0 0.0
    %456 = vmatprep.subr.mxu0 0.0
    %457 = vmatpush1.msra.mxu0 0.0
    %458 = vmatprep.subr.mxu0 0.0
    %459 = vmatpush1.msra.mxu0 0.0
    %460 = vmatprep.subr.mxu0 0.0
    %461 = vmatpush1.msra.mxu0 0.0
    %462 = vmatprep.subr.mxu0 0.0
    %463 = vmatpush1.msra.mxu0 0.0
    %464 = vmatprep.subr.mxu0 0.0
    %465 = vmatpush1.msra.mxu0 0.0
    %466 = vmatprep.subr.mxu0 0.0
    %467 = vmatpush1.msra.mxu0 0.0
    %468 = vmatprep.subr.mxu0 0.0
    %469 = vmatpush1.msra.mxu0 0.0
    %470 = vmatprep.subr.mxu0 0.0
    %471 = vmatpush1.msra.mxu0 0.0
    %472 = vmatprep.subr.mxu0 0.0
    %473 = vmatpush1.msra.mxu0 0.0
    %474 = vmatprep.subr.mxu0 0.0
    %475 = vmatpush1.msra.mxu0 0.0
    %476 = vmatprep.subr.mxu0 0.0
    %477 = vmatpush1.msra.mxu0 0.0
    %478 = vmatprep.subr.mxu0 0.0
    %479 = vmatpush1.msra.mxu0 0.0
    %480 = vmatprep.subr.mxu0 0.0
    %481 = vmatpush1.msra.mxu0 0.0
    %482 = vmatprep.subr.mxu0 0.0
    %483 = vmatpush1.msra.mxu0 0.0
    %484 = vmatprep.subr.mxu0 0.0
    %485 = vmatpush1.msra.mxu0 0.0
    %486 = vmatprep.subr.mxu0 0.0
    %487 = vmatpush1.msra.mxu0 0.0
    %488 = vmatprep.subr.mxu0 0.0
    %489 = vmatpush1.msra.mxu0 0.0
    %490 = vmatprep.subr.mxu0 0.0
    %491 = vmatpush1.msra.mxu0 0.0
    %492 = vmatprep.subr.mxu0 0.0
    %493 = vmatpush1.msra.mxu0 0.0
    %494 = vmatprep.subr.mxu0 0.0
    %495 = vmatpush1.msra.mxu0 0.0
    %496 = vmatprep.subr.mxu0 0.0
    %497 = vmatpush1.msra.mxu0 0.0
    %498 = vmatprep.subr.mxu0 0.0
    %499 = vmatpush1.msra.mxu0 0.0
    %500 = vmatprep.mubr.f32.mxu0 0.0
    %501 = vmatmul.mubr.f32.gmra.mrb[0].mxu0 %v434
    %v502 = vpop.f32.mrb[0].mxu0
    %v503 = vadd.f32 %v225, %v502
    %v504 = vpop.f32.mrb[0].mxu0
    %505 = vdwg.mxu0
    %v506 = vmax.f32 %v503, 0.0
    %v507 = vld [vmem:[%s3] sm:$0xff]
    %v508 = vld [vmem:[%s3 + $0x8] sm:$0xff]
    %v509 = vld [vmem:[%s3 + $0x10] sm:$0xff]
    %v510 = vld [vmem:[%s3 + $0x18] sm:$0xff]
    %v511 = vld [vmem:[%s3 + $0x20] sm:$0xff]
    %v512 = vld [vmem:[%s3 + $0x28] sm:$0xff]
    %v513 = vld [vmem:[%s3 + $0x30] sm:$0xff]
    %v514 = vld [vmem:[%s3 + $0x38] sm:$0xff]
    %v515 = vld [vmem:[%s4] sm:$0x1]
    %v517 = vlaneseq
    %v518 = vshrl.u32 %v517, 7
    %v519 = vsub.s32 0, %v518
    %v520 = vrot.slane %v515, %v519
    %vm522 = vcmask 523264
    %v524 = vsel %vm522, %v506, 0
    %526 = vmatprep.subr.mxu0 0.0
    %527 = vmatpush1.msra.mxu0 %v507
    %528 = vmatprep.subr.mxu0 0.0
    %529 = vmatpush1.msra.mxu0 %v508
    %530 = vmatprep.subr.mxu0 0.0
    %531 = vmatpush1.msra.mxu0 %v509
    %532 = vmatprep.subr.mxu0 0.0
    %533 = vmatpush1.msra.mxu0 %v510
    %534 = vmatprep.subr.mxu0 0.0
    %535 = vmatpush1.msra.mxu0 %v511
    %536 = vmatprep.subr.mxu0 0.0
    %537 = vmatpush1.msra.mxu0 %v512
    %538 = vmatprep.subr.mxu0 0.0
    %539 = vmatpush1.msra.mxu0 %v513
    %540 = vmatprep.subr.mxu0 0.0
    %541 = vmatpush1.msra.mxu0 %v514
    %542 = vmatprep.subr.mxu0 0.0
    %543 = vmatpush1.msra.mxu0 0.0
    %544 = vmatprep.subr.mxu0 0.0
    %545 = vmatpush1.msra.mxu0 0.0
    %546 = vmatprep.subr.mxu0 0.0
    %547 = vmatpush1.msra.mxu0 0.0
    %548 = vmatprep.subr.mxu0 0.0
    %549 = vmatpush1.msra.mxu0 0.0
    %550 = vmatprep.subr.mxu0 0.0
    %551 = vmatpush1.msra.mxu0 0.0
    %552 = vmatprep.subr.mxu0 0.0
    %553 = vmatpush1.msra.mxu0 0.0
    %554 = vmatprep.subr.mxu0 0.0
    %555 = vmatpush1.msra.mxu0 0.0
    %556 = vmatprep.subr.mxu0 0.0
    %557 = vmatpush1.msra.mxu0 0.0
    %558 = vmatprep.subr.mxu0 0.0
    %559 = vmatpush1.msra.mxu0 0.0
    %560 = vmatprep.subr.mxu0 0.0
    %561 = vmatpush1.msra.mxu0 0.0
    %562 = vmatprep.subr.mxu0 0.0
    %563 = vmatpush1.msra.mxu0 0.0
    %564 = vmatprep.subr.mxu0 0.0
    %565 = vmatpush1.msra.mxu0 0.0
    %566 = vmatprep.subr.mxu0 0.0
    %567 = vmatpush1.msra.mxu0 0.0
    %568 = vmatprep.subr.mxu0 0.0
    %569 = vmatpush1.msra.mxu0 0.0
    %570 = vmatprep.subr.mxu0 0.0
    %571 = vmatpush1.msra.mxu0 0.0
    %572 = vmatprep.subr.mxu0 0.0
    %573 = vmatpush1.msra.mxu0 0.0
    %574 = vmatprep.subr.mxu0 0.0
    %575 = vmatpush1.msra.mxu0 0.0
    %576 = vmatprep.subr.mxu0 0.0
    %577 = vmatpush1.msra.mxu0 0.0
    %578 = vmatprep.subr.mxu0 0.0
    %579 = vmatpush1.msra.mxu0 0.0
    %580 = vmatprep.subr.mxu0 0.0
    %581 = vmatpush1.msra.mxu0 0.0
    %582 = vmatprep.subr.mxu0 0.0
    %583 = vmatpush1.msra.mxu0 0.0
    %584 = vmatprep.subr.mxu0 0.0
    %585 = vmatpush1.msra.mxu0 0.0
    %586 = vmatprep.subr.mxu0 0.0
    %587 = vmatpush1.msra.mxu0 0.0
    %588 = vmatprep.subr.mxu0 0.0
    %589 = vmatpush1.msra.mxu0 0.0
    %590 = vmatprep.mubr.f32.mxu0 0.0
    %591 = vmatmul.mubr.f32.gmra.mrb[0].mxu0 %v524
    %v592 = vpop.f32.mrb[0].mxu0
    %v593 = vadd.f32 %v520, %v592
    %v594 = vpop.f32.mrb[0].mxu0
    %595 = vdwg.mxu0
    %v596 = vmax.f32 %v593, 0.0
    %v597 = vld [vmem:[%s5] sm:$0xff]
    %v598 = vld [vmem:[%s5 + $0x8] sm:$0xff]
    %v599 = vld [vmem:[%s5 + $0x10] sm:$0xff]
    %v600 = vld [vmem:[%s5 + $0x18] sm:$0xff]
    %v601 = vld [vmem:[%s5 + $0x20] sm:$0xff]
    %v602 = vld [vmem:[%s5 + $0x28] sm:$0xff]
    %v603 = vld [vmem:[%s5 + $0x30] sm:$0xff]
    %v604 = vld [vmem:[%s5 + $0x38] sm:$0xff]
    %v605 = vld [vmem:[#allocation2] sm:$0x1]
    %v607 = vlaneseq
    %v608 = vshrl.u32 %v607, 7
    %v609 = vsub.s32 0, %v608
    %v610 = vrot.slane %v605, %v609
    %v613 = vsel %vm522, %v596, 0
    %615 = vmatprep.subr.mxu0 0.0
    %616 = vmatpush1.msra.mxu0 %v597
    %617 = vmatprep.subr.mxu0 0.0
    %618 = vmatpush1.msra.mxu0 %v598
    %619 = vmatprep.subr.mxu0 0.0
    %620 = vmatpush1.msra.mxu0 %v599
    %621 = vmatprep.subr.mxu0 0.0
    %622 = vmatpush1.msra.mxu0 %v600
    %623 = vmatprep.subr.mxu0 0.0
    %624 = vmatpush1.msra.mxu0 %v601
    %625 = vmatprep.subr.mxu0 0.0
    %626 = vmatpush1.msra.mxu0 %v602
    %627 = vmatprep.subr.mxu0 0.0
    %628 = vmatpush1.msra.mxu0 %v603
    %629 = vmatprep.subr.mxu0 0.0
    %630 = vmatpush1.msra.mxu0 %v604
    %631 = vmatprep.subr.mxu0 0.0
    %632 = vmatpush1.msra.mxu0 0.0
    %633 = vmatprep.subr.mxu0 0.0
    %634 = vmatpush1.msra.mxu0 0.0
    %635 = vmatprep.subr.mxu0 0.0
    %636 = vmatpush1.msra.mxu0 0.0
    %637 = vmatprep.subr.mxu0 0.0
    %638 = vmatpush1.msra.mxu0 0.0
    %639 = vmatprep.subr.mxu0 0.0
    %640 = vmatpush1.msra.mxu0 0.0
    %641 = vmatprep.subr.mxu0 0.0
    %642 = vmatpush1.msra.mxu0 0.0
    %643 = vmatprep.subr.mxu0 0.0
    %644 = vmatpush1.msra.mxu0 0.0
    %645 = vmatprep.subr.mxu0 0.0
    %646 = vmatpush1.msra.mxu0 0.0
    %647 = vmatprep.subr.mxu0 0.0
    %648 = vmatpush1.msra.mxu0 0.0
    %649 = vmatprep.subr.mxu0 0.0
    %650 = vmatpush1.msra.mxu0 0.0
    %651 = vmatprep.subr.mxu0 0.0
    %652 = vmatpush1.msra.mxu0 0.0
    %653 = vmatprep.subr.mxu0 0.0
    %654 = vmatpush1.msra.mxu0 0.0
    %655 = vmatprep.subr.mxu0 0.0
    %656 = vmatpush1.msra.mxu0 0.0
    %657 = vmatprep.subr.mxu0 0.0
    %658 = vmatpush1.msra.mxu0 0.0
    %659 = vmatprep.subr.mxu0 0.0
    %660 = vmatpush1.msra.mxu0 0.0
    %661 = vmatprep.subr.mxu0 0.0
    %662 = vmatpush1.msra.mxu0 0.0
    %663 = vmatprep.subr.mxu0 0.0
    %664 = vmatpush1.msra.mxu0 0.0
    %665 = vmatprep.subr.mxu0 0.0
    %666 = vmatpush1.msra.mxu0 0.0
    %667 = vmatprep.subr.mxu0 0.0
    %668 = vmatpush1.msra.mxu0 0.0
    %669 = vmatprep.subr.mxu0 0.0
    %670 = vmatpush1.msra.mxu0 0.0
    %671 = vmatprep.subr.mxu0 0.0
    %672 = vmatpush1.msra.mxu0 0.0
    %673 = vmatprep.subr.mxu0 0.0
    %674 = vmatpush1.msra.mxu0 0.0
    %675 = vmatprep.subr.mxu0 0.0
    %676 = vmatpush1.msra.mxu0 0.0
    %677 = vmatprep.subr.mxu0 0.0
    %678 = vmatpush1.msra.mxu0 0.0
    %679 = vmatprep.mubr.f32.mxu0 0.0
    %680 = vmatmul.mubr.f32.gmra.mrb[0].mxu0 %v613
    %v681 = vpop.f32.mrb[0].mxu0
    %v682 = vadd.f32 %v610, %v681
    %v683 = vpop.f32.mrb[0].mxu0
    %684 = vdwg.mxu0
    %v685 = vmax.f32 %v682, 0.0
    %vm686 = vcmask 7168
    %687 = vst.msk [vmem:[%s7] sm:$0xff] %vm686, %v685
    // Predicated region
    $region38: #{tpu_custom_call.1} parent=1 // pred_check
      _
    $region39: #{tpu_custom_call.1} parent=1 // pred_check_branch
      %689 = sbr.rel (0) target = $region41
    $region40: #{tpu_custom_call.1} parent=1 // pred_region
      _
    $region41: #{tpu_custom_call.1} parent=1 // pred_fallthru
      _
    // Predicated region
    $region42: #{tpu_custom_call.1} parent=1 // pred_check
      _
    $region43: #{tpu_custom_call.1} parent=1 // pred_check_branch
      %691 = sbr.rel (0) target = $region45
    $region44: #{tpu_custom_call.1} parent=1 // pred_region
      _
    $region45: #{tpu_custom_call.1} parent=1 // pred_fallthru
      _
    %692 = vsyncpa [#allocation4], 1
    %693 = vsyncpa [#allocation6], 1

</llo_original>
